<compile_context>
chip_gen: v7x
topology: tpu7x:2x2x1
jax: 0.10.0
libtpu: 0.0.40
codegen_flags: <defaults>
</compile_context>

<pallas_src>
import functools

import jax
import jax.numpy as jnp
from jax import lax
from jax.experimental import pallas as pl
from jax.experimental.pallas import tpu as pltpu


# PyTorch nn.Linear layout: weight is [out_features, in_features].
_DIMS = [(64, 2), (32, 64), (16, 32), (8, 16), (1, 8)]


def _round_up(n, m):
    return ((n + m - 1) // m) * m


def mlp_kernel(x_ref,
               w1_ref, b1_ref,
               w2_ref, b2_ref,
               w3_ref, b3_ref,
               w4_ref, b4_ref,
               w5_ref, b5_ref,
               o_ref,
               *, sub_b, n_sub):
    """One batch tile of the forward pass.

    x_ref : [TILE_B, 2]   f32   (PyTorch layout; batch on sublanes)
    w1,b1 : [64, 2] f32 , [64, 1] f32
    wk,bk : [out_k, in_k] bf16 , [out_k, 1] f32   (k = 2..5)
    o_ref : [1, TILE_B]   f32   (lane-dense output slab; batch on lanes)
    """
    w1 = w1_ref[...]
    b1 = b1_ref[...]
    w2 = w2_ref[...]
    b2 = b2_ref[...]
    w3 = w3_ref[...]
    b3 = b3_ref[...]
    w4 = w4_ref[...]
    b4 = b4_ref[...]
    w5 = w5_ref[...]
    b5 = b5_ref[...]

    def sub_block(j, carry):
        start = pl.multiple_of(j * sub_b, sub_b)
        x = x_ref[pl.ds(start, sub_b), :]            # [sub_b, 2] f32

        # Layer 1: contract the feature dim of BOTH operands -> [64, sub_b].
        # rhs contracting dim is minormost => transpose_rhs matmul on the MXU;
        # this performs the batch->lane relayout in-kernel (no wrapper transpose).
        h = lax.dot_general(w1, x, (((1,), (1,)), ((), ())),
                            preferred_element_type=jnp.float32) + b1
        h = jnp.maximum(h, 0.0)

        h = jnp.dot(w2, h.astype(jnp.bfloat16),
                    preferred_element_type=jnp.float32) + b2
        h = jnp.maximum(h, 0.0)

        h = jnp.dot(w3, h.astype(jnp.bfloat16),
                    preferred_element_type=jnp.float32) + b3
        h = jnp.maximum(h, 0.0)

        h = jnp.dot(w4, h.astype(jnp.bfloat16),
                    preferred_element_type=jnp.float32) + b4
        h = jnp.maximum(h, 0.0)

        z = jnp.dot(w5, h.astype(jnp.bfloat16),
                    preferred_element_type=jnp.float32) + b5
        o_ref[:, pl.ds(start, sub_b)] = jax.nn.sigmoid(z)    # [1, sub_b] f32
        return carry

    # Short, fixed trip count: unrolled so LLO sees the whole schedule, while each
    # sub-slab bounds the live activation set (<= ~32 f32 vregs for layer 1).
    lax.fori_loop(0, n_sub, sub_block, None, unroll=True)


def prepare_params(params):
    """One-time cast to kernel dtypes (PyTorch layout kept): layer-1 w/b f32,
    layer 2-5 weights bf16, all biases f32 [out, 1]. Call OUTSIDE the hot loop."""
    prepared = []
    for li in range(5):
        w_dtype = jnp.float32 if li == 0 else jnp.bfloat16
        prepared.append(params[2 * li].astype(w_dtype))
        prepared.append(params[2 * li + 1].reshape(-1, 1).astype(jnp.float32))
    return tuple(prepared)


@functools.partial(jax.jit, static_argnames=("max_tile_b", "sub_lanes"))
def binary_classifier_forward(x, params, max_tile_b=2048, sub_lanes=512):
    """x: [B, 2] float32 (PyTorch layout). params: flat tuple (w1, b1, ..., w5, b5),
    ideally pre-cast via prepare_params(). Returns [B, 1] float32 probabilities."""
    B, feat = x.shape
    assert feat == 2
    x = x.astype(jnp.float32)

    # ---- tile sizing -------------------------------------------------------
    # >= 2 batch tiles when B allows (keeps both v7x TCs busy); lane-multiple tiles;
    # large tiles amortize per-grid-step overhead; tiles above `sub_lanes` are walked
    # by the in-kernel sub-slab loop, so round them to a sub-slab multiple.
    tile_b = min(max_tile_b, _round_up(max((B + 1) // 2, 1), 128))
    if tile_b > sub_lanes:
        tile_b = _round_up(tile_b, sub_lanes)
        sub_b = sub_lanes
    else:
        sub_b = tile_b
    n_sub = tile_b // sub_b
    n_tiles = pl.cdiv(B, tile_b)

    # ---- operands (zero-cost no-op casts when params were prepared) ---------
    w_dtypes = (jnp.float32,) + (jnp.bfloat16,) * 4
    in_specs = [pl.BlockSpec((tile_b, 2), lambda i: (i, 0))]
    flat_wb = []
    for li in range(5):
        w = params[2 * li].astype(w_dtypes[li])
        b = params[2 * li + 1].reshape(-1, 1).astype(jnp.float32)
        flat_wb += [w, b]
        # VMEM-resident whole-array blocks (never re-indexed over the batch grid).
        in_specs += [pl.BlockSpec(w.shape, lambda i: (0, 0)),
                     pl.BlockSpec(b.shape, lambda i: (0, 0))]

    work_b = n_tiles * tile_b
    flops = 2 * sum(o * i for o, i in _DIMS) * work_b
    param_bytes = sum(w.size * w.dtype.itemsize + b.size * 4
                      for w, b in zip(flat_wb[0::2], flat_wb[1::2]))
    cost = pl.CostEstimate(
        flops=flops,
        transcendentals=work_b,                       # sigmoid exp per output lane
        bytes_accessed=B * 2 * 4 + B * 4 + param_bytes,
    )

    out = pl.pallas_call(
        functools.partial(mlp_kernel, sub_b=sub_b, n_sub=n_sub),
        out_shape=jax.ShapeDtypeStruct((1, B), jnp.float32),
        grid=(n_tiles,),
        in_specs=in_specs,
        out_specs=pl.BlockSpec((1, tile_b), lambda i: (0, i)),
        compiler_params=pltpu.CompilerParams(
            dimension_semantics=("parallel",)),       # shard batch tiles across TCs (v7x)
        cost_estimate=cost,
    )(x, *flat_wb)

    return out.reshape(B, 1)   # (1, B) -> (B, 1): layout-identical, metadata-only


def init_params(key):
    """Deterministic init matching torch.nn.Linear default scheme and layout
    (weight [out, in], bias stored as [out, 1])."""
    params = []
    for out_f, in_f in _DIMS:
        kw, kb, key = jax.random.split(key, 3)
        bound = 1.0 / (in_f ** 0.5)
        w = jax.random.uniform(kw, (out_f, in_f), jnp.float32, -bound, bound)
        b = jax.random.uniform(kb, (out_f, 1), jnp.float32, -bound, bound)
        params += [w, b]
    return tuple(params)


def reference_forward(x, params):
    """Pure-JAX f32 reference."""
    w1, b1, w2, b2, w3, b3, w4, b4, w5, b5 = params
    h = jnp.maximum(x @ w1.T + b1.T, 0.0)
    h = jnp.maximum(h @ w2.T + b2.T, 0.0)
    h = jnp.maximum(h @ w3.T + b3.T, 0.0)
    h = jnp.maximum(h @ w4.T + b4.T, 0.0)
    return jax.nn.sigmoid(h @ w5.T + b5.T)


if __name__ == "__main__":
    key = jax.random.PRNGKey(0)
    kx1, kx2, kp = jax.random.split(key, 3)
    params = init_params(kp)
    kernel_params = prepare_params(params)   # one-time dtype prep: no per-call casts

    # Single-tile check (tile_b = 128, n_sub = 1, partial edge block).
    B1 = 8
    x1 = jax.random.normal(kx1, (B1, 2), jnp.float32)
    out1 = jax.block_until_ready(binary_classifier_forward(x1, kernel_params))
    ref1 = reference_forward(x1, params)
    assert out1.shape == (B1, 1)
    assert jnp.allclose(out1, ref1, atol=2e-2, rtol=2e-2)

    # Multi-tile check: 2 grid tiles (both v7x cores get work), a partial last tile,
    # and the in-kernel sub-slab loop (tile_b = 1536, sub_b = 512, n_sub = 3).
    B2 = 2500
    x2 = jax.random.normal(kx2, (B2, 2), jnp.float32)
    out2 = jax.block_until_ready(binary_classifier_forward(x2, kernel_params))
    ref2 = reference_forward(x2, params)
    assert out2.shape == (B2, 1)
    assert jnp.allclose(out2, ref2, atol=2e-2, rtol=2e-2)

    print("KERNEL_OK")
</pallas_src>

<mosaic_0001>
module attributes {stable_mosaic.version = 11 : i64} {
  func.func @mlp_kernel(%arg0: i32, %arg1: memref<128x2xf32, #tpu.memory_space<vmem>>, %arg2: memref<64x2xf32, #tpu.memory_space<vmem>>, %arg3: memref<64x1xf32, #tpu.memory_space<vmem>>, %arg4: memref<32x64xbf16, #tpu.memory_space<vmem>>, %arg5: memref<32x1xf32, #tpu.memory_space<vmem>>, %arg6: memref<16x32xbf16, #tpu.memory_space<vmem>>, %arg7: memref<16x1xf32, #tpu.memory_space<vmem>>, %arg8: memref<8x16xbf16, #tpu.memory_space<vmem>>, %arg9: memref<8x1xf32, #tpu.memory_space<vmem>>, %arg10: memref<1x8xbf16, #tpu.memory_space<vmem>>, %arg11: memref<1x1xf32, #tpu.memory_space<vmem>>, %arg12: memref<1x128xf32, #tpu.memory_space<vmem>>) attributes {dimension_semantics = [#tpu.dimension_semantics<parallel>], iteration_bounds = array<i64: 1>, scalar_prefetch = 0 : i64, scratch_operands = 0 : i64, tpu.core_type = #tpu.core_type<tc>, window_params = [{transform_indices = @transform_0, window_bounds = array<i64: 128, 2>}, {pipeline_mode = #tpu.pipeline_mode<synchronous>, transform_indices = @transform_1, window_bounds = array<i64: 64, 2>}, {pipeline_mode = #tpu.pipeline_mode<synchronous>, transform_indices = @transform_2, window_bounds = array<i64: 64, 1>}, {pipeline_mode = #tpu.pipeline_mode<synchronous>, transform_indices = @transform_3, window_bounds = array<i64: 32, 64>}, {pipeline_mode = #tpu.pipeline_mode<synchronous>, transform_indices = @transform_4, window_bounds = array<i64: 32, 1>}, {pipeline_mode = #tpu.pipeline_mode<synchronous>, transform_indices = @transform_5, window_bounds = array<i64: 16, 32>}, {pipeline_mode = #tpu.pipeline_mode<synchronous>, transform_indices = @transform_6, window_bounds = array<i64: 16, 1>}, {pipeline_mode = #tpu.pipeline_mode<synchronous>, transform_indices = @transform_7, window_bounds = array<i64: 8, 16>}, {pipeline_mode = #tpu.pipeline_mode<synchronous>, transform_indices = @transform_8, window_bounds = array<i64: 8, 1>}, {pipeline_mode = #tpu.pipeline_mode<synchronous>, transform_indices = @transform_9, window_bounds = array<i64: 1, 8>}, {pipeline_mode = #tpu.pipeline_mode<synchronous>, transform_indices = @transform_10, window_bounds = array<i64: 1, 1>}, {transform_indices = @transform_11, window_bounds = array<i64: 1, 128>}]} {
    %c0 = arith.constant 0 : index
    %c0_0 = arith.constant 0 : index
    %0 = vector.load %arg2[%c0, %c0_0] : memref<64x2xf32, #tpu.memory_space<vmem>>, vector<64x2xf32>
    %c0_1 = arith.constant 0 : index
    %c0_2 = arith.constant 0 : index
    %1 = vector.load %arg3[%c0_1, %c0_2] : memref<64x1xf32, #tpu.memory_space<vmem>>, vector<64x1xf32>
    %c0_3 = arith.constant 0 : index
    %c0_4 = arith.constant 0 : index
    %2 = vector.load %arg4[%c0_3, %c0_4] : memref<32x64xbf16, #tpu.memory_space<vmem>>, vector<32x64xbf16>
    %c0_5 = arith.constant 0 : index
    %c0_6 = arith.constant 0 : index
    %3 = vector.load %arg5[%c0_5, %c0_6] : memref<32x1xf32, #tpu.memory_space<vmem>>, vector<32x1xf32>
    %c0_7 = arith.constant 0 : index
    %c0_8 = arith.constant 0 : index
    %4 = vector.load %arg6[%c0_7, %c0_8] : memref<16x32xbf16, #tpu.memory_space<vmem>>, vector<16x32xbf16>
    %c0_9 = arith.constant 0 : index
    %c0_10 = arith.constant 0 : index
    %5 = vector.load %arg7[%c0_9, %c0_10] : memref<16x1xf32, #tpu.memory_space<vmem>>, vector<16x1xf32>
    %c0_11 = arith.constant 0 : index
    %c0_12 = arith.constant 0 : index
    %6 = vector.load %arg8[%c0_11, %c0_12] : memref<8x16xbf16, #tpu.memory_space<vmem>>, vector<8x16xbf16>
    %c0_13 = arith.constant 0 : index
    %c0_14 = arith.constant 0 : index
    %7 = vector.load %arg9[%c0_13, %c0_14] : memref<8x1xf32, #tpu.memory_space<vmem>>, vector<8x1xf32>
    %c0_15 = arith.constant 0 : index
    %c0_16 = arith.constant 0 : index
    %8 = vector.load %arg10[%c0_15, %c0_16] : memref<1x8xbf16, #tpu.memory_space<vmem>>, vector<1x8xbf16>
    %c0_17 = arith.constant 0 : index
    %c0_18 = arith.constant 0 : index
    %9 = vector.load %arg11[%c0_17, %c0_18] : memref<1x1xf32, #tpu.memory_space<vmem>>, vector<1x1xf32>
    %c0_i32 = arith.constant 0 : i32
    %c128_i32 = arith.constant 128 : i32
    %10 = arith.muli %c0_i32, %c128_i32 : i32
    %11 = tpu.assume_multiple %10, 128 : i32
    %12 = arith.index_cast %11 : i32 to index
    %c0_19 = arith.constant 0 : index
    %13 = vector.load %arg1[%12, %c0_19] : memref<128x2xf32, #tpu.memory_space<vmem>>, vector<128x2xf32>
    %cst = arith.constant dense<0.000000e+00> : vector<64x128xf32>
    %14 = tpu.matmul %0, %13, %cst {dimension_numbers = #tpu.dot_dimension_numbers<[1], [1], [0], [0], [0, 0, 1, 0], [], []>} : vector<64x2xf32>, vector<128x2xf32>, vector<64x128xf32> -> vector<64x128xf32>
    %15 = vector.broadcast %1 : vector<64x1xf32> to vector<64x128xf32>
    %16 = arith.addf %14, %15 : vector<64x128xf32>
    %cst_20 = arith.constant 0.000000e+00 : f32
    %17 = vector.broadcast %cst_20 : f32 to vector<64x128xf32>
    %18 = arith.maximumf %16, %17 : vector<64x128xf32>
    %19 = arith.truncf %18 : vector<64x128xf32> to vector<64x128xbf16>
    %cst_21 = arith.constant dense<0.000000e+00> : vector<32x128xf32>
    %20 = tpu.matmul %2, %19, %cst_21 {dimension_numbers = #tpu.dot_dimension_numbers<[1], [0], [0], [1], [0, 0, 1, 1], [], []>} : vector<32x64xbf16>, vector<64x128xbf16>, vector<32x128xf32> -> vector<32x128xf32>
    %21 = vector.broadcast %3 : vector<32x1xf32> to vector<32x128xf32>
    %22 = arith.addf %20, %21 : vector<32x128xf32>
    %cst_22 = arith.constant 0.000000e+00 : f32
    %23 = vector.broadcast %cst_22 : f32 to vector<32x128xf32>
    %24 = arith.maximumf %22, %23 : vector<32x128xf32>
    %25 = arith.truncf %24 : vector<32x128xf32> to vector<32x128xbf16>
    %cst_23 = arith.constant dense<0.000000e+00> : vector<16x128xf32>
    %26 = tpu.matmul %4, %25, %cst_23 {dimension_numbers = #tpu.dot_dimension_numbers<[1], [0], [0], [1], [0, 0, 1, 1], [], []>} : vector<16x32xbf16>, vector<32x128xbf16>, vector<16x128xf32> -> vector<16x128xf32>
    %27 = vector.broadcast %5 : vector<16x1xf32> to vector<16x128xf32>
    %28 = arith.addf %26, %27 : vector<16x128xf32>
    %cst_24 = arith.constant 0.000000e+00 : f32
    %29 = vector.broadcast %cst_24 : f32 to vector<16x128xf32>
    %30 = arith.maximumf %28, %29 : vector<16x128xf32>
    %31 = arith.truncf %30 : vector<16x128xf32> to vector<16x128xbf16>
    %cst_25 = arith.constant dense<0.000000e+00> : vector<8x128xf32>
    %32 = tpu.matmul %6, %31, %cst_25 {dimension_numbers = #tpu.dot_dimension_numbers<[1], [0], [0], [1], [0, 0, 1, 1], [], []>} : vector<8x16xbf16>, vector<16x128xbf16>, vector<8x128xf32> -> vector<8x128xf32>
    %33 = vector.broadcast %7 : vector<8x1xf32> to vector<8x128xf32>
    %34 = arith.addf %32, %33 : vector<8x128xf32>
    %cst_26 = arith.constant 0.000000e+00 : f32
    %35 = vector.broadcast %cst_26 : f32 to vector<8x128xf32>
    %36 = arith.maximumf %34, %35 : vector<8x128xf32>
    %37 = arith.truncf %36 : vector<8x128xf32> to vector<8x128xbf16>
    %cst_27 = arith.constant dense<0.000000e+00> : vector<1x128xf32>
    %38 = tpu.matmul %8, %37, %cst_27 {dimension_numbers = #tpu.dot_dimension_numbers<[1], [0], [0], [1], [0, 0, 1, 1], [], []>} : vector<1x8xbf16>, vector<8x128xbf16>, vector<1x128xf32> -> vector<1x128xf32>
    %39 = vector.broadcast %9 : vector<1x1xf32> to vector<1x128xf32>
    %40 = arith.addf %38, %39 : vector<1x128xf32>
    %41 = arith.negf %40 : vector<1x128xf32>
    %42 = math.exp %41 : vector<1x128xf32>
    %cst_28 = arith.constant 1.000000e+00 : f32
    %43 = vector.broadcast %cst_28 : f32 to vector<1x128xf32>
    %44 = arith.addf %43, %42 : vector<1x128xf32>
    %45 = arith.divf %43, %44 : vector<1x128xf32>
    %c0_29 = arith.constant 0 : index
    %46 = arith.index_cast %11 : i32 to index
    %47 = vector.load %arg12[%c0_29, %46] : memref<1x128xf32, #tpu.memory_space<vmem>>, vector<1x128xf32>
    tpu.vector_store %arg12[%c0_29, %46], %45 {strides = array<i32>} : memref<1x128xf32, #tpu.memory_space<vmem>>, vector<1x128xf32>,
    %c1_i32 = arith.constant 1 : i32
    return
  }
  func.func @transform_0(%arg0: i32) -> (i32, i32) {
    %c0_i32 = arith.constant 0 : i32
    %c0_i32_0 = arith.constant 0 : i32
    return %arg0, %c0_i32 : i32, i32
  }
  func.func @transform_1(%arg0: i32) -> (i32, i32) {
    %c0_i32 = arith.constant 0 : i32
    %c0_i32_0 = arith.constant 0 : i32
    %c0_i32_1 = arith.constant 0 : i32
    return %c0_i32, %c0_i32_0 : i32, i32
  }
  func.func @transform_2(%arg0: i32) -> (i32, i32) {
    %c0_i32 = arith.constant 0 : i32
    %c0_i32_0 = arith.constant 0 : i32
    %c0_i32_1 = arith.constant 0 : i32
    return %c0_i32, %c0_i32_0 : i32, i32
  }
  func.func @transform_3(%arg0: i32) -> (i32, i32) {
    %c0_i32 = arith.constant 0 : i32
    %c0_i32_0 = arith.constant 0 : i32
    %c0_i32_1 = arith.constant 0 : i32
    return %c0_i32, %c0_i32_0 : i32, i32
  }
  func.func @transform_4(%arg0: i32) -> (i32, i32) {
    %c0_i32 = arith.constant 0 : i32
    %c0_i32_0 = arith.constant 0 : i32
    %c0_i32_1 = arith.constant 0 : i32
    return %c0_i32, %c0_i32_0 : i32, i32
  }
  func.func @transform_5(%arg0: i32) -> (i32, i32) {
    %c0_i32 = arith.constant 0 : i32
    %c0_i32_0 = arith.constant 0 : i32
    %c0_i32_1 = arith.constant 0 : i32
    return %c0_i32, %c0_i32_0 : i32, i32
  }
  func.func @transform_6(%arg0: i32) -> (i32, i32) {
    %c0_i32 = arith.constant 0 : i32
    %c0_i32_0 = arith.constant 0 : i32
    %c0_i32_1 = arith.constant 0 : i32
    return %c0_i32, %c0_i32_0 : i32, i32
  }
  func.func @transform_7(%arg0: i32) -> (i32, i32) {
    %c0_i32 = arith.constant 0 : i32
    %c0_i32_0 = arith.constant 0 : i32
    %c0_i32_1 = arith.constant 0 : i32
    return %c0_i32, %c0_i32_0 : i32, i32
  }
  func.func @transform_8(%arg0: i32) -> (i32, i32) {
    %c0_i32 = arith.constant 0 : i32
    %c0_i32_0 = arith.constant 0 : i32
    %c0_i32_1 = arith.constant 0 : i32
    return %c0_i32, %c0_i32_0 : i32, i32
  }
  func.func @transform_9(%arg0: i32) -> (i32, i32) {
    %c0_i32 = arith.constant 0 : i32
    %c0_i32_0 = arith.constant 0 : i32
    %c0_i32_1 = arith.constant 0 : i32
    return %c0_i32, %c0_i32_0 : i32, i32
  }
  func.func @transform_10(%arg0: i32) -> (i32, i32) {
    %c0_i32 = arith.constant 0 : i32
    %c0_i32_0 = arith.constant 0 : i32
    %c0_i32_1 = arith.constant 0 : i32
    return %c0_i32, %c0_i32_0 : i32, i32
  }
  func.func @transform_11(%arg0: i32) -> (i32, i32) {
    %c0_i32 = arith.constant 0 : i32
    %c0_i32_0 = arith.constant 0 : i32
    return %c0_i32, %arg0 : i32, i32
  }
}

</mosaic_0001>

<llo_original>
// kernel: binary_classifier_forward.1
$region0: #{binary_classifier_forward.1}
  #allocation0 [shape = 'u32[]', space=smem, size = 0x4, offset = 0x4, fixed_abs, tag = 'smem constant byte address 0x4 - core index']
  #allocation1 [shape = 'u32[144,128]{1,0:T(1,128)}', space=vmem, size = 0x12000, scoped, tag = 'internal scratch']
  #allocation2 [shape = 'f32[1,1]{1,0:T(1,128)S(1)}', space=vmem, size = 0x200, scoped, tag = 'scoped memory for binary_classifier_forward.1']
  %s0 = inlined_call_operand.vmem [shape: f32[8,2], index: 0, kind: input, shape index: {}]
  %s1 = inlined_call_operand.vmem [shape: f32[64,2], index: 1, kind: input, shape index: {}]
  %s2 = inlined_call_operand.vmem [shape: f32[64,1], index: 2, kind: input, shape index: {}]
  %s3 = inlined_call_operand.vmem [shape: bf16[32,64], index: 3, kind: input, shape index: {}]
  %s4 = inlined_call_operand.vmem [shape: f32[32,1], index: 4, kind: input, shape index: {}]
  %s5 = inlined_call_operand.vmem [shape: bf16[16,32], index: 5, kind: input, shape index: {}]
  %s6 = inlined_call_operand.vmem [shape: f32[16,1], index: 6, kind: input, shape index: {}]
  %s7 = inlined_call_operand.vmem [shape: bf16[8,16], index: 7, kind: input, shape index: {}]
  %s8 = inlined_call_operand.vmem [shape: f32[8,1], index: 8, kind: input, shape index: {}]
  %s9 = inlined_call_operand.vmem [shape: bf16[1,8], index: 9, kind: input, shape index: {}]
  %s10 = inlined_call_operand.<no memory space> [shape: f32[1,1], index: 10, kind: input, shape index: {}]
  %s11 = inlined_call_operand.hbm [shape: f32[1,8], index: 11, kind: output, shape index: {}]
  %s12 = sld [smem:[#allocation0]]
  $region54: #{binary_classifier_forward.1} parent=0
    _
  %s14 = ssub.s32 1, %s12
  %s15 = scalar_select 0, %s14, %s12
  %v16 = vstv %s10
  %17 = vst [vmem:[#allocation2] sm:$0x1] %v16
  $region1: #{binary_classifier_forward.1} parent=0
    #allocation3 [shape = 'u8[512]{0}', space=vmem, size = 0x400, scoped, tag = 'output window, operand 0, single buffered']
    #allocation4 [shape = 's32[1]{0}', space=sflag, size = 0x4, scoped, tag = 'scoped memory for binary_classifier_forward.1']
    %18 = vsyncpa [#allocation4], 0
    // Predicated region
    $region2: #{binary_classifier_forward.1} parent=1 // pred_check
      _
    $region3: #{binary_classifier_forward.1} parent=1 // pred_check_branch
      %20 = sbr.rel (0) target = $region5
    $region4: #{binary_classifier_forward.1} parent=1 // pred_region
      _
    $region5: #{binary_classifier_forward.1} parent=1 // pred_fallthru
      _
    // Predicated region
    $region6: #{binary_classifier_forward.1} parent=1 // pred_check
      _
    $region7: #{binary_classifier_forward.1} parent=1 // pred_check_branch
      %22 = sbr.rel (0) target = $region9
    $region8: #{binary_classifier_forward.1} parent=1 // pred_region
      _
    $region9: #{binary_classifier_forward.1} parent=1 // pred_fallthru
      _
    // Predicated region
    $region10: #{binary_classifier_forward.1} parent=1 // pred_check
      _
    $region11: #{binary_classifier_forward.1} parent=1 // pred_check_branch
      %24 = sbr.rel (0) target = $region13
    $region12: #{binary_classifier_forward.1} parent=1 // pred_region
      _
    $region13: #{binary_classifier_forward.1} parent=1 // pred_fallthru
      _
    // Predicated region
    $region14: #{binary_classifier_forward.1} parent=1 // pred_check
      _
    $region15: #{binary_classifier_forward.1} parent=1 // pred_check_branch
      %26 = sbr.rel (0) target = $region17
    $region16: #{binary_classifier_forward.1} parent=1 // pred_region
      _
    $region17: #{binary_classifier_forward.1} parent=1 // pred_fallthru
      _
    // Predicated region
    $region18: #{binary_classifier_forward.1} parent=1 // pred_check
      _
    $region19: #{binary_classifier_forward.1} parent=1 // pred_check_branch
      %28 = sbr.rel (0) target = $region21
    $region20: #{binary_classifier_forward.1} parent=1 // pred_region
      _
    $region21: #{binary_classifier_forward.1} parent=1 // pred_fallthru
      _
    // Predicated region
    $region22: #{binary_classifier_forward.1} parent=1 // pred_check
      _
    $region23: #{binary_classifier_forward.1} parent=1 // pred_check_branch
      %30 = sbr.rel (0) target = $region25
    $region24: #{binary_classifier_forward.1} parent=1 // pred_region
      _
    $region25: #{binary_classifier_forward.1} parent=1 // pred_fallthru
      _
    // Predicated region
    $region26: #{binary_classifier_forward.1} parent=1 // pred_check
      _
    $region27: #{binary_classifier_forward.1} parent=1 // pred_check_branch
      %32 = sbr.rel (0) target = $region29
    $region28: #{binary_classifier_forward.1} parent=1 // pred_region
      _
    $region29: #{binary_classifier_forward.1} parent=1 // pred_fallthru
      _
    // Predicated region
    $region30: #{binary_classifier_forward.1} parent=1 // pred_check
      _
    $region31: #{binary_classifier_forward.1} parent=1 // pred_check_branch
      %34 = sbr.rel (0) target = $region33
    $region32: #{binary_classifier_forward.1} parent=1 // pred_region
      _
    $region33: #{binary_classifier_forward.1} parent=1 // pred_fallthru
      _
    // Predicated region
    $region34: #{binary_classifier_forward.1} parent=1 // pred_check
      _
    $region35: #{binary_classifier_forward.1} parent=1 // pred_check_branch
      %36 = sbr.rel (0) target = $region37
    $region36: #{binary_classifier_forward.1} parent=1 // pred_region
      _
    $region37: #{binary_classifier_forward.1} parent=1 // pred_fallthru
      _
    // Predicated region
    $region38: #{binary_classifier_forward.1} parent=1 // pred_check
      _
    $region39: #{binary_classifier_forward.1} parent=1 // pred_check_branch
      %38 = sbr.rel (0) target = $region41
    $region40: #{binary_classifier_forward.1} parent=1 // pred_region
      _
    $region41: #{binary_classifier_forward.1} parent=1 // pred_fallthru
      _
    // Predicated region
    $region42: #{binary_classifier_forward.1} parent=1 // pred_check
      _
    $region43: #{binary_classifier_forward.1} parent=1 // pred_check_branch
      %40 = sbr.rel (0) target = $region45
    $region44: #{binary_classifier_forward.1} parent=1 // pred_region
      _
    $region45: #{binary_classifier_forward.1} parent=1 // pred_fallthru
      _
    %v42 = vld [vmem:[%s1] sm:$0xff]
    %v43 = vld [vmem:[%s1 + $0x8] sm:$0xff]
    %v44 = vld [vmem:[%s1 + $0x10] sm:$0xff]
    %v45 = vld [vmem:[%s1 + $0x18] sm:$0xff]
    %v46 = vld [vmem:[%s1 + $0x20] sm:$0xff]
    %v47 = vld [vmem:[%s1 + $0x28] sm:$0xff]
    %v48 = vld [vmem:[%s1 + $0x30] sm:$0xff]
    %v49 = vld [vmem:[%s1 + $0x38] sm:$0xff]
    %v50 = vld [vmem:[%s2] sm:$0xff]
    %v51 = vld [vmem:[%s2 + $0x8] sm:$0xff]
    %v52 = vld [vmem:[%s2 + $0x10] sm:$0xff]
    %v53 = vld [vmem:[%s2 + $0x18] sm:$0xff]
    %v54 = vld [vmem:[%s2 + $0x20] sm:$0xff]
    %v55 = vld [vmem:[%s2 + $0x28] sm:$0xff]
    %v56 = vld [vmem:[%s2 + $0x30] sm:$0xff]
    %v57 = vld [vmem:[%s2 + $0x38] sm:$0xff]
    %v58 = vld [vmem:[%s3] sm:$0xf]
    %v59 = vld [vmem:[%s3 + $0x4] sm:$0xf]
    %v60 = vld [vmem:[%s3 + $0x8] sm:$0xf]
    %v61 = vld [vmem:[%s3 + $0xc] sm:$0xf]
    %v62 = vld [vmem:[%s4] sm:$0xff]
    %v63 = vld [vmem:[%s4 + $0x8] sm:$0xff]
    %v64 = vld [vmem:[%s4 + $0x10] sm:$0xff]
    %v65 = vld [vmem:[%s4 + $0x18] sm:$0xff]
    %v66 = vld [vmem:[%s5] sm:$0xf]
    %v67 = vld [vmem:[%s5 + $0x4] sm:$0xf]
    %v68 = vld [vmem:[%s6] sm:$0xff]
    %v69 = vld [vmem:[%s6 + $0x8] sm:$0xff]
    %v70 = vld [vmem:[%s7] sm:$0xf]
    %v71 = vld [vmem:[%s8] sm:$0xff]
    %v72 = vld [vmem:[%s9] sm:$0x1]
    %v73 = vld [vmem:[#allocation2] sm:$0x1]
    %v74 = vld [vmem:[%s0] sm:$0xff]
    %v75 = vld [vmem:[%s0 + $0x8] sm:$0xff]
    %v76 = vld [vmem:[%s0 + $0x10] sm:$0xff]
    %v77 = vld [vmem:[%s0 + $0x18] sm:$0xff]
    %v78 = vld [vmem:[%s0 + $0x20] sm:$0xff]
    %v79 = vld [vmem:[%s0 + $0x28] sm:$0xff]
    %v80 = vld [vmem:[%s0 + $0x30] sm:$0xff]
    %v81 = vld [vmem:[%s0 + $0x38] sm:$0xff]
    %v82 = vld [vmem:[%s0 + $0x40] sm:$0xff]
    %v83 = vld [vmem:[%s0 + $0x48] sm:$0xff]
    %v84 = vld [vmem:[%s0 + $0x50] sm:$0xff]
    %v85 = vld [vmem:[%s0 + $0x58] sm:$0xff]
    %v86 = vld [vmem:[%s0 + $0x60] sm:$0xff]
    %v87 = vld [vmem:[%s0 + $0x68] sm:$0xff]
    %v88 = vld [vmem:[%s0 + $0x70] sm:$0xff]
    %v89 = vld [vmem:[%s0 + $0x78] sm:$0xff]
    %91 = vset.pattern.permute.xlu0 0
    %92 = vperm.xlu0 %91, %v50
    %v93 = vpop.permute.xlu0 %92
    %96 = vset.pattern.permute.xlu0 0
    %97 = vperm.xlu0 %96, %v51
    %v98 = vpop.permute.xlu0 %97
    %101 = vset.pattern.permute.xlu0 0
    %102 = vperm.xlu0 %101, %v52
    %v103 = vpop.permute.xlu0 %102
    %106 = vset.pattern.permute.xlu0 0
    %107 = vperm.xlu0 %106, %v53
    %v108 = vpop.permute.xlu0 %107
    %111 = vset.pattern.permute.xlu0 0
    %112 = vperm.xlu0 %111, %v54
    %v113 = vpop.permute.xlu0 %112
    %116 = vset.pattern.permute.xlu0 0
    %117 = vperm.xlu0 %116, %v55
    %v118 = vpop.permute.xlu0 %117
    %121 = vset.pattern.permute.xlu0 0
    %122 = vperm.xlu0 %121, %v56
    %v123 = vpop.permute.xlu0 %122
    %126 = vset.pattern.permute.xlu0 0
    %127 = vperm.xlu0 %126, %v57
    %v128 = vpop.permute.xlu0 %127
    %vm130 = vcmask 15360
    %v132 = vsel %vm130, %v42, 0
    %v135 = vsel %vm130, %v43, 0
    %v138 = vsel %vm130, %v44, 0
    %v141 = vsel %vm130, %v45, 0
    %v144 = vsel %vm130, %v46, 0
    %v147 = vsel %vm130, %v47, 0
    %v150 = vsel %vm130, %v48, 0
    %v153 = vsel %vm130, %v49, 0
    %v156 = vsel %vm130, %v74, 0
    %v159 = vsel %vm130, %v75, 0
    %v162 = vsel %vm130, %v76, 0
    %v165 = vsel %vm130, %v77, 0
    %v168 = vsel %vm130, %v78, 0
    %v171 = vsel %vm130, %v79, 0
    %v174 = vsel %vm130, %v80, 0
    %v177 = vsel %vm130, %v81, 0
    %v180 = vsel %vm130, %v82, 0
    %v183 = vsel %vm130, %v83, 0
    %v186 = vsel %vm130, %v84, 0
    %v189 = vsel %vm130, %v85, 0
    %v192 = vsel %vm130, %v86, 0
    %v195 = vsel %vm130, %v87, 0
    %v198 = vsel %vm130, %v88, 0
    %v201 = vsel %vm130, %v89, 0
    %203 = vmatprep.subr.mxu0 0.0
    %204 = vmatpush1.xpose.msra.mxu0 %v156
    %205 = vmatprep.subr.mxu0 0.0
    %206 = vmatpush1.xpose.msra.mxu0 %v159
    %207 = vmatprep.subr.mxu0 0.0
    %208 = vmatpush1.xpose.msra.mxu0 %v162
    %209 = vmatprep.subr.mxu0 0.0
    %210 = vmatpush1.xpose.msra.mxu0 %v165
    %211 = vmatprep.subr.mxu0 0.0
    %212 = vmatpush1.xpose.msra.mxu0 %v168
    %213 = vmatprep.subr.mxu0 0.0
    %214 = vmatpush1.xpose.msra.mxu0 %v171
    %215 = vmatprep.subr.mxu0 0.0
    %216 = vmatpush1.xpose.msra.mxu0 %v174
    %217 = vmatprep.subr.mxu0 0.0
    %218 = vmatpush1.xpose.msra.mxu0 %v177
    %219 = vmatprep.subr.mxu0 0.0
    %220 = vmatpush1.xpose.msra.mxu0 %v180
    %221 = vmatprep.subr.mxu0 0.0
    %222 = vmatpush1.xpose.msra.mxu0 %v183
    %223 = vmatprep.subr.mxu0 0.0
    %224 = vmatpush1.xpose.msra.mxu0 %v186
    %225 = vmatprep.subr.mxu0 0.0
    %226 = vmatpush1.xpose.msra.mxu0 %v189
    %227 = vmatprep.subr.mxu0 0.0
    %228 = vmatpush1.xpose.msra.mxu0 %v192
    %229 = vmatprep.subr.mxu0 0.0
    %230 = vmatpush1.xpose.msra.mxu0 %v195
    %231 = vmatprep.subr.mxu0 0.0
    %232 = vmatpush1.xpose.msra.mxu0 %v198
    %233 = vmatprep.subr.mxu0 0.0
    %234 = vmatpush1.xpose.msra.mxu0 %v201
    %235 = vmatprep.subr.mxu0 0.0
    %236 = vmatpush1.xpose.msra.mxu0 0.0
    %237 = vmatprep.subr.mxu0 0.0
    %238 = vmatpush1.xpose.msra.mxu0 0.0
    %239 = vmatprep.subr.mxu0 0.0
    %240 = vmatpush1.xpose.msra.mxu0 0.0
    %241 = vmatprep.subr.mxu0 0.0
    %242 = vmatpush1.xpose.msra.mxu0 0.0
    %243 = vmatprep.subr.mxu0 0.0
    %244 = vmatpush1.xpose.msra.mxu0 0.0
    %245 = vmatprep.subr.mxu0 0.0
    %246 = vmatpush1.xpose.msra.mxu0 0.0
    %247 = vmatprep.subr.mxu0 0.0
    %248 = vmatpush1.xpose.msra.mxu0 0.0
    %249 = vmatprep.subr.mxu0 0.0
    %250 = vmatpush1.xpose.msra.mxu0 0.0
    %251 = vmatprep.subr.mxu0 0.0
    %252 = vmatpush1.xpose.msra.mxu0 0.0
    %253 = vmatprep.subr.mxu0 0.0
    %254 = vmatpush1.xpose.msra.mxu0 0.0
    %255 = vmatprep.subr.mxu0 0.0
    %256 = vmatpush1.xpose.msra.mxu0 0.0
    %257 = vmatprep.subr.mxu0 0.0
    %258 = vmatpush1.xpose.msra.mxu0 0.0
    %259 = vmatprep.subr.mxu0 0.0
    %260 = vmatpush1.xpose.msra.mxu0 0.0
    %261 = vmatprep.subr.mxu0 0.0
    %262 = vmatpush1.xpose.msra.mxu0 0.0
    %263 = vmatprep.subr.mxu0 0.0
    %264 = vmatpush1.xpose.msra.mxu0 0.0
    %265 = vmatprep.subr.mxu0 0.0
    %266 = vmatpush1.xpose.msra.mxu0 0.0
    %267 = vmatprep.mubr.f32.mxu0 0.0
    %268 = vmatmul.mubr.f32.gmra.mrb[0].mxu0 %v132
    %v269 = vpop.f32.mrb[0].mxu0
    %v270 = vadd.f32 %v93, %v269
    %v271 = vpop.f32.mrb[0].mxu0
    %272 = vmatprep.mubr.f32.mxu0 0.0
    %273 = vmatmul.mubr.f32.gmra.mrb[0].mxu0 %v135
    %v274 = vpop.f32.mrb[0].mxu0
    %v275 = vadd.f32 %v98, %v274
    %v276 = vpop.f32.mrb[0].mxu0
    %277 = vmatprep.mubr.f32.mxu0 0.0
    %278 = vmatmul.mubr.f32.gmra.mrb[0].mxu0 %v138
    %v279 = vpop.f32.mrb[0].mxu0
    %v280 = vadd.f32 %v103, %v279
    %v281 = vpop.f32.mrb[0].mxu0
    %282 = vmatprep.mubr.f32.mxu0 0.0
    %283 = vmatmul.mubr.f32.gmra.mrb[0].mxu0 %v141
    %v284 = vpop.f32.mrb[0].mxu0
    %v285 = vadd.f32 %v108, %v284
    %v286 = vpop.f32.mrb[0].mxu0
    %287 = vmatprep.mubr.f32.mxu0 0.0
    %288 = vmatmul.mubr.f32.gmra.mrb[0].mxu0 %v144
    %v289 = vpop.f32.mrb[0].mxu0
    %v290 = vadd.f32 %v113, %v289
    %v291 = vpop.f32.mrb[0].mxu0
    %292 = vmatprep.mubr.f32.mxu0 0.0
    %293 = vmatmul.mubr.f32.gmra.mrb[0].mxu0 %v147
    %v294 = vpop.f32.mrb[0].mxu0
    %v295 = vadd.f32 %v118, %v294
    %v296 = vpop.f32.mrb[0].mxu0
    %297 = vmatprep.mubr.f32.mxu0 0.0
    %298 = vmatmul.mubr.f32.gmra.mrb[0].mxu0 %v150
    %v299 = vpop.f32.mrb[0].mxu0
    %v300 = vadd.f32 %v123, %v299
    %v301 = vpop.f32.mrb[0].mxu0
    %302 = vmatprep.mubr.f32.mxu0 0.0
    %303 = vmatmul.mubr.f32.gmra.mrb[0].mxu0 %v153
    %v304 = vpop.f32.mrb[0].mxu0
    %v305 = vadd.f32 %v128, %v304
    %v306 = vpop.f32.mrb[0].mxu0
    %307 = vdwg.mxu0
    %v308 = vmax.f32 %v270, 0.0
    %v309 = vmax.f32 %v275, 0.0
    %v310 = vmax.f32 %v280, 0.0
    %v311 = vmax.f32 %v285, 0.0
    %v312 = vmax.f32 %v290, 0.0
    %v313 = vmax.f32 %v295, 0.0
    %v314 = vmax.f32 %v300, 0.0
    %v315 = vmax.f32 %v305, 0.0
    %v316 = vpack.c.bf16 %v309, %v308
    %v317 = vpack.c.bf16 %v311, %v310
    %v318 = vpack.c.bf16 %v313, %v312
    %v319 = vpack.c.bf16 %v315, %v314
    %321 = vset.pattern.permute.xlu0 0
    %322 = vperm.xlu0 %321, %v62
    %v323 = vpop.permute.xlu0 %322
    %326 = vset.pattern.permute.xlu0 0
    %327 = vperm.xlu0 %326, %v63
    %v328 = vpop.permute.xlu0 %327
    %331 = vset.pattern.permute.xlu0 0
    %332 = vperm.xlu0 %331, %v64
    %v333 = vpop.permute.xlu0 %332
    %336 = vset.pattern.permute.xlu0 0
    %337 = vperm.xlu0 %336, %v65
    %v338 = vpop.permute.xlu0 %337
    %v344 = vunpack.c.l.b16 %v58
    %v345 = vunpack.c.l.b16 %v59
    %v346 = vunpack.c.l.b16 %v60
    %v347 = vunpack.c.l.b16 %v61
    %v348 = vpack.c.b16 %v345, %v344
    %v349 = vpack.c.b16 %v347, %v346
    %vm350 = vcmask 523264
    %v352 = vsel %vm350, %v348, 0
    %v355 = vsel %vm350, %v349, 0
    %357 = vmatprep.subr.bf16.mxu0 0
    %358 = vmatpush1.bf16.msra.mxu0 %v316
    %359 = vmatprep.subr.bf16.mxu0 0
    %360 = vmatpush1.bf16.msra.mxu0 %v317
    %361 = vmatprep.subr.bf16.mxu0 0
    %362 = vmatpush1.bf16.msra.mxu0 %v318
    %363 = vmatprep.subr.bf16.mxu0 0
    %364 = vmatpush1.bf16.msra.mxu0 %v319
    %365 = vmatprep.subr.bf16.mxu0 0
    %366 = vmatpush1.bf16.msra.mxu0 0
    %367 = vmatprep.subr.bf16.mxu0 0
    %368 = vmatpush1.bf16.msra.mxu0 0
    %369 = vmatprep.subr.bf16.mxu0 0
    %370 = vmatpush1.bf16.msra.mxu0 0
    %371 = vmatprep.subr.bf16.mxu0 0
    %372 = vmatpush1.bf16.msra.mxu0 0
    %373 = vmatprep.subr.bf16.mxu0 0
    %374 = vmatpush1.bf16.msra.mxu0 0
    %375 = vmatprep.subr.bf16.mxu0 0
    %376 = vmatpush1.bf16.msra.mxu0 0
    %377 = vmatprep.subr.bf16.mxu0 0
    %378 = vmatpush1.bf16.msra.mxu0 0
    %379 = vmatprep.subr.bf16.mxu0 0
    %380 = vmatpush1.bf16.msra.mxu0 0
    %381 = vmatprep.subr.bf16.mxu0 0
    %382 = vmatpush1.bf16.msra.mxu0 0
    %383 = vmatprep.subr.bf16.mxu0 0
    %384 = vmatpush1.bf16.msra.mxu0 0
    %385 = vmatprep.subr.bf16.mxu0 0
    %386 = vmatpush1.bf16.msra.mxu0 0
    %387 = vmatprep.subr.bf16.mxu0 0
    %388 = vmatpush1.bf16.msra.mxu0 0
    %389 = vmatprep.mubr.bf16.mxu0 0
    %390 = vmatmul.mubr.bf16.gmra.mrb[0].mxu0 %v352
    %v391 = vpop.f32.mrb[0].mxu0
    %v392 = vadd.f32 %v323, %v391
    %v393 = vpop.f32.mrb[0].mxu0
    %v394 = vpop.f32.mrb[0].mxu0
    %v395 = vadd.f32 %v328, %v394
    %v396 = vpop.f32.mrb[0].mxu0
    %397 = vmatprep.mubr.bf16.mxu0 0
    %398 = vmatmul.mubr.bf16.gmra.mrb[0].mxu0 %v355
    %v399 = vpop.f32.mrb[0].mxu0
    %v400 = vadd.f32 %v333, %v399
    %v401 = vpop.f32.mrb[0].mxu0
    %v402 = vpop.f32.mrb[0].mxu0
    %v403 = vadd.f32 %v338, %v402
    %v404 = vpop.f32.mrb[0].mxu0
    %405 = vdwg.mxu0
    %v406 = vmax.f32 %v392, 0.0
    %v407 = vmax.f32 %v395, 0.0
    %v408 = vmax.f32 %v400, 0.0
    %v409 = vmax.f32 %v403, 0.0
    %v410 = vpack.c.bf16 %v407, %v406
    %v411 = vpack.c.bf16 %v409, %v408
    %413 = vset.pattern.permute.xlu0 0
    %414 = vperm.xlu0 %413, %v68
    %v415 = vpop.permute.xlu0 %414
    %418 = vset.pattern.permute.xlu0 0
    %419 = vperm.xlu0 %418, %v69
    %v420 = vpop.permute.xlu0 %419
    %v424 = vunpack.c.l.b16 %v66
    %v425 = vunpack.c.l.b16 %v67
    %v426 = vpack.c.b16 %v425, %v424
    %vm427 = vcmask 261120
    %v429 = vsel %vm427, %v426, 0
    %431 = vmatprep.subr.bf16.mxu0 0
    %432 = vmatpush1.bf16.msra.mxu0 %v410
    %433 = vmatprep.subr.bf16.mxu0 0
    %434 = vmatpush1.bf16.msra.mxu0 %v411
    %435 = vmatprep.subr.bf16.mxu0 0
    %436 = vmatpush1.bf16.msra.mxu0 0
    %437 = vmatprep.subr.bf16.mxu0 0
    %438 = vmatpush1.bf16.msra.mxu0 0
    %439 = vmatprep.subr.bf16.mxu0 0
    %440 = vmatpush1.bf16.msra.mxu0 0
    %441 = vmatprep.subr.bf16.mxu0 0
    %442 = vmatpush1.bf16.msra.mxu0 0
    %443 = vmatprep.subr.bf16.mxu0 0
    %444 = vmatpush1.bf16.msra.mxu0 0
    %445 = vmatprep.subr.bf16.mxu0 0
    %446 = vmatpush1.bf16.msra.mxu0 0
    %447 = vmatprep.subr.bf16.mxu0 0
    %448 = vmatpush1.bf16.msra.mxu0 0
    %449 = vmatprep.subr.bf16.mxu0 0
    %450 = vmatpush1.bf16.msra.mxu0 0
    %451 = vmatprep.subr.bf16.mxu0 0
    %452 = vmatpush1.bf16.msra.mxu0 0
    %453 = vmatprep.subr.bf16.mxu0 0
    %454 = vmatpush1.bf16.msra.mxu0 0
    %455 = vmatprep.subr.bf16.mxu0 0
    %456 = vmatpush1.bf16.msra.mxu0 0
    %457 = vmatprep.subr.bf16.mxu0 0
    %458 = vmatpush1.bf16.msra.mxu0 0
    %459 = vmatprep.subr.bf16.mxu0 0
    %460 = vmatpush1.bf16.msra.mxu0 0
    %461 = vmatprep.subr.bf16.mxu0 0
    %462 = vmatpush1.bf16.msra.mxu0 0
    %463 = vmatprep.mubr.bf16.mxu0 0
    %464 = vmatmul.mubr.bf16.gmra.mrb[0].mxu0 %v429
    %v465 = vpop.f32.mrb[0].mxu0
    %v466 = vadd.f32 %v415, %v465
    %v467 = vpop.f32.mrb[0].mxu0
    %v468 = vpop.f32.mrb[0].mxu0
    %v469 = vadd.f32 %v420, %v468
    %v470 = vpop.f32.mrb[0].mxu0
    %471 = vdwg.mxu0
    %v472 = vmax.f32 %v466, 0.0
    %v473 = vmax.f32 %v469, 0.0
    %v474 = vpack.c.bf16 %v473, %v472
    %476 = vset.pattern.permute.xlu0 0
    %477 = vperm.xlu0 %476, %v71
    %v478 = vpop.permute.xlu0 %477
    %vm480 = vcmask 130048
    %v482 = vsel %vm480, %v70, 0
    %484 = vmatprep.subr.bf16.mxu0 0
    %485 = vmatpush1.bf16.msra.mxu0 %v474
    %486 = vmatprep.subr.bf16.mxu0 0
    %487 = vmatpush1.bf16.msra.mxu0 0
    %488 = vmatprep.subr.bf16.mxu0 0
    %489 = vmatpush1.bf16.msra.mxu0 0
    %490 = vmatprep.subr.bf16.mxu0 0
    %491 = vmatpush1.bf16.msra.mxu0 0
    %492 = vmatprep.subr.bf16.mxu0 0
    %493 = vmatpush1.bf16.msra.mxu0 0
    %494 = vmatprep.subr.bf16.mxu0 0
    %495 = vmatpush1.bf16.msra.mxu0 0
    %496 = vmatprep.subr.bf16.mxu0 0
    %497 = vmatpush1.bf16.msra.mxu0 0
    %498 = vmatprep.subr.bf16.mxu0 0
    %499 = vmatpush1.bf16.msra.mxu0 0
    %500 = vmatprep.subr.bf16.mxu0 0
    %501 = vmatpush1.bf16.msra.mxu0 0
    %502 = vmatprep.subr.bf16.mxu0 0
    %503 = vmatpush1.bf16.msra.mxu0 0
    %504 = vmatprep.subr.bf16.mxu0 0
    %505 = vmatpush1.bf16.msra.mxu0 0
    %506 = vmatprep.subr.bf16.mxu0 0
    %507 = vmatpush1.bf16.msra.mxu0 0
    %508 = vmatprep.subr.bf16.mxu0 0
    %509 = vmatpush1.bf16.msra.mxu0 0
    %510 = vmatprep.subr.bf16.mxu0 0
    %511 = vmatpush1.bf16.msra.mxu0 0
    %512 = vmatprep.subr.bf16.mxu0 0
    %513 = vmatpush1.bf16.msra.mxu0 0
    %514 = vmatprep.subr.bf16.mxu0 0
    %515 = vmatpush1.bf16.msra.mxu0 0
    %516 = vmatprep.mubr.bf16.mxu0 0
    %517 = vmatmul.mubr.bf16.gmra.mrb[0].mxu0 %v482
    %v518 = vpop.f32.mrb[0].mxu0
    %v519 = vadd.f32 %v478, %v518
    %v520 = vpop.f32.mrb[0].mxu0
    %v521 = vpop.f32.mrb[0].mxu0
    %v522 = vpop.f32.mrb[0].mxu0
    %523 = vdwg.mxu0
    %v524 = vmax.f32 %v519, 0.0
    %v525 = vpack.c.bf16 %v524, %v524
    %527 = vset.pattern.permute.xlu0 0
    %528 = vperm.xlu0 %527, %v73
    %v529 = vpop.permute.xlu0 %528
    %v531 = vlaneseq
    %v532 = vshrl.u32 %v531, 7
    %v533 = vsub.s32 0, %v532
    %v534 = vrot.slane %v529, %v533
    %vm535 = vcmask 64512
    %v537 = vsel %vm535, %v72, 0
    %vm539 = vcmask 1043456
    %v541 = vsel %vm539, %v525, 0
    %543 = vmatprep.subr.bf16.mxu0 0
    %544 = vmatpush1.bf16.msra.mxu0 %v541
    %545 = vmatprep.subr.bf16.mxu0 0
    %546 = vmatpush1.bf16.msra.mxu0 0
    %547 = vmatprep.subr.bf16.mxu0 0
    %548 = vmatpush1.bf16.msra.mxu0 0
    %549 = vmatprep.subr.bf16.mxu0 0
    %550 = vmatpush1.bf16.msra.mxu0 0
    %551 = vmatprep.subr.bf16.mxu0 0
    %552 = vmatpush1.bf16.msra.mxu0 0
    %553 = vmatprep.subr.bf16.mxu0 0
    %554 = vmatpush1.bf16.msra.mxu0 0
    %555 = vmatprep.subr.bf16.mxu0 0
    %556 = vmatpush1.bf16.msra.mxu0 0
    %557 = vmatprep.subr.bf16.mxu0 0
    %558 = vmatpush1.bf16.msra.mxu0 0
    %559 = vmatprep.subr.bf16.mxu0 0
    %560 = vmatpush1.bf16.msra.mxu0 0
    %561 = vmatprep.subr.bf16.mxu0 0
    %562 = vmatpush1.bf16.msra.mxu0 0
    %563 = vmatprep.subr.bf16.mxu0 0
    %564 = vmatpush1.bf16.msra.mxu0 0
    %565 = vmatprep.subr.bf16.mxu0 0
    %566 = vmatpush1.bf16.msra.mxu0 0
    %567 = vmatprep.subr.bf16.mxu0 0
    %568 = vmatpush1.bf16.msra.mxu0 0
    %569 = vmatprep.subr.bf16.mxu0 0
    %570 = vmatpush1.bf16.msra.mxu0 0
    %571 = vmatprep.subr.bf16.mxu0 0
    %572 = vmatpush1.bf16.msra.mxu0 0
    %573 = vmatprep.subr.bf16.mxu0 0
    %574 = vmatpush1.bf16.msra.mxu0 0
    %575 = vmatprep.mubr.bf16.mxu0 0
    %576 = vmatmul.mubr.bf16.gmra.mrb[0].mxu0 %v537
    %v577 = vpop.f32.mrb[0].mxu0
    %v578 = vadd.f32 %v534, %v577
    %v579 = vpop.f32.mrb[0].mxu0
    %v580 = vpop.f32.mrb[0].mxu0
    %v581 = vpop.f32.mrb[0].mxu0
    %582 = vdwg.mxu0
    %v583 = vxor.u32 %v578, 2147483648
    %v584 = vmul.f32 %v583, 1.442695
    %v585 = vpow.pop %v584
    %v586 = vadd.f32 %v585, 1.0
    %v587 = vrcp.pop %v586
    %v588 = vmul.f32 1.0, %v587
    %589 = vst [vmem:[#allocation3] sm:$0x1] %v588
    // Predicated region
    $region46: #{binary_classifier_forward.1} parent=1 // pred_check
      _
    $region47: #{binary_classifier_forward.1} parent=1 // pred_check_branch
      %591 = sbr.rel (0) target = $region49
    $region48: #{binary_classifier_forward.1} parent=1 // pred_region
      %s593 = ssub.s32 16, 16
      %594 = vsyncadd [#allocation4], %s593
      %s596 = sshll.u32 [#allocation3], 4
      %s597 = int_to_ptr.vmem [resolvable:$true] %s596
      %599 = dma.vmem_to_hbm [thread:$0]  %s597, 16, %s11, [#allocation4]
    $region49: #{binary_classifier_forward.1} parent=1 // pred_fallthru
      _
    // Predicated region
    $region50: #{binary_classifier_forward.1} parent=1 // pred_check
      _
    $region51: #{binary_classifier_forward.1} parent=1 // pred_check_branch
      %601 = sbr.rel (0) target = $region53
    $region52: #{binary_classifier_forward.1} parent=1 // pred_region
      %602 = dma.done [#allocation4], 16
    $region53: #{binary_classifier_forward.1} parent=1 // pred_fallthru
      _
    %603 = vsyncpa [#allocation4], 1

</llo_original>
